<compile_context>
chip_gen: v7x
topology: tpu7x:2x2x1
jax: 0.10.0
libtpu: 0.0.40
codegen_flags: <defaults>
</compile_context>

<pallas_src>
import jax
import jax.numpy as jnp
from jax import lax
from jax.experimental import pallas as pl
from jax.experimental.pallas import tpu as pltpu

_LANE = 128


def _round_up(x, m):
    return (x + m - 1) // m * m


def _decoder_tile_kernel(x_ref, w_ref, b_ref, o1_ref, o2_ref):
    # x_ref: (1, C_in, tile_n)   w_ref: (2*C_out, C_in)   b_ref: (2*C_out, 1) f32
    y = jnp.dot(w_ref[...], x_ref[0], preferred_element_type=jnp.float32)
    y = y + b_ref[...]                       # broadcast bias along lanes (f32)
    c_out = o1_ref.shape[1]
    o1_ref[0] = y[:c_out].astype(o1_ref.dtype)
    o2_ref[0] = y[c_out:].astype(o2_ref.dtype)


def _decoder_small_kernel(x_ref, w_ref, b_ref, o1_ref, o2_ref):
    # Whole problem in a single grid step.  x_ref: (B, C_in, HW); B small & static.
    c_out = o1_ref.shape[1]
    w = w_ref[...]
    b = b_ref[...]
    for bi in range(x_ref.shape[0]):         # static unroll over tiny batch
        y = jnp.dot(w, x_ref[bi], preferred_element_type=jnp.float32) + b
        o1_ref[bi] = y[:c_out].astype(o1_ref.dtype)
        o2_ref[bi] = y[c_out:].astype(o2_ref.dtype)


def fuse_decoder_params(w1, b1, w2, b2, compute_dtype=None):
    """One-time preprocessing: fuse decoder1/decoder2 1x1-conv weights & biases.

    w1/w2: (C_out, C_in, 1, 1)   b1/b2: (C_out,)
    Returns w_cat (2*C_out, C_in) [optionally cast to compute_dtype, e.g. bf16]
    and b_cat (2*C_out, 1) kept in f32 (added after the f32 MXU accumulation).
    """
    c_out, c_in = w1.shape[0], w1.shape[1]
    w_cat = jnp.concatenate(
        [w1.reshape(c_out, c_in), w2.reshape(c_out, c_in)], axis=0)
    if compute_dtype is not None:
        w_cat = w_cat.astype(compute_dtype)
    b_cat = jnp.concatenate([b1, b2], axis=0).astype(jnp.float32).reshape(2 * c_out, 1)
    return w_cat, b_cat


def enet_decoders(x_nchw, w_cat, b_cat, *, max_tile_n=16384, out_dtype=None):
    """Fused decoder1/decoder2 (two 1x1 convs) as one Pallas matmul kernel.

    x_nchw: (B, C_in, H, W)   w_cat: (2*C_out, C_in)   b_cat: (2*C_out, 1) f32
    Returns (out1, out2), each (B, C_out, H, W) — same as nn.Conv2d(C_in, C_out, 1).
    """
    B, C_in, H, W = x_nchw.shape
    two_c_out = w_cat.shape[0]
    C_out = two_c_out // 2
    HW = H * W
    out_dtype = jnp.dtype(out_dtype if out_dtype is not None else x_nchw.dtype)

    # Free reshape (row-major): spatial becomes the lane axis.
    x3 = x_nchw.reshape(B, C_in, HW)
    if x3.dtype != w_cat.dtype:
        x3 = x3.astype(w_cat.dtype)          # bf16 streaming when weights are bf16

    in_bytes = x3.dtype.itemsize
    out_bytes = out_dtype.itemsize
    per_lane_bytes = C_in * in_bytes + 2 * C_out * out_bytes

    cost = pl.CostEstimate(
        flops=2 * B * HW * two_c_out * C_in,
        transcendentals=0,
        bytes_accessed=B * HW * per_lane_bytes
        + w_cat.size * w_cat.dtype.itemsize + b_cat.size * b_cat.dtype.itemsize)

    out_sds = jax.ShapeDtypeStruct((B, C_out, HW), out_dtype)

    small = (HW < 2 * _LANE) and (B * HW * per_lane_bytes <= (4 << 20))

    if small:
        # Single grid step over the whole problem: fixed pallas_call overhead paid once.
        o1, o2 = pl.pallas_call(
            _decoder_small_kernel,
            out_shape=(out_sds, out_sds),
            grid_spec=pltpu.PrefetchScalarGridSpec(
                num_scalar_prefetch=0,
                grid=(1,),
                in_specs=[
                    pl.BlockSpec((B, C_in, HW), lambda i: (0, 0, 0)),
                    pl.BlockSpec((two_c_out, C_in), lambda i: (0, 0)),
                    pl.BlockSpec((two_c_out, 1), lambda i: (0, 0)),
                ],
                out_specs=[
                    pl.BlockSpec((B, C_out, HW), lambda i: (0, 0, 0)),
                    pl.BlockSpec((B, C_out, HW), lambda i: (0, 0, 0)),
                ],
            ),
            compiler_params=pltpu.CompilerParams(
                dimension_semantics=("arbitrary",)),
            cost_estimate=cost,
        )(x3, w_cat, b_cat)
    else:
        # Tiled, HBM-bound path: biggest lane tile that fits a safe double-buffer
        # budget (safe on v5e/v6e 128 MiB and v7x 64 MiB physical VMEM).
        budget = 40 << 20
        vmem_cap_lanes = max(_LANE, (budget // (2 * per_lane_bytes)) // _LANE * _LANE)
        tile_cap = min(max_tile_n, vmem_cap_lanes)

        if HW <= tile_cap:
            tile_n = HW                      # one full block (equals array dim)
            if B == 1 and HW >= 2 * _LANE:
                # Keep >= 2 grid steps so both v7x TensorCores get work.
                tile_n = _round_up((HW + 1) // 2, _LANE)
        else:
            tile_n = tile_cap                # multiple of 128; partial last tile OK
        grid_n = -(-HW // tile_n)

        vmem_need = (2 * per_lane_bytes * tile_n
                     + w_cat.size * w_cat.dtype.itemsize
                     + b_cat.size * b_cat.dtype.itemsize
                     + (1 << 20))
        # Never below the scoped default; cap well under v7x's 64 MiB physical.
        vmem_limit = int(max(32 << 20, min(vmem_need * 5 // 4, 56 << 20)))

        o1, o2 = pl.pallas_call(
            _decoder_tile_kernel,
            out_shape=(out_sds, out_sds),
            grid_spec=pltpu.PrefetchScalarGridSpec(
                num_scalar_prefetch=0,
                grid=(B, grid_n),
                in_specs=[
                    pl.BlockSpec((1, C_in, tile_n), lambda b, j: (b, 0, j)),
                    pl.BlockSpec((two_c_out, C_in), lambda b, j: (0, 0)),
                    pl.BlockSpec((two_c_out, 1), lambda b, j: (0, 0)),
                ],
                out_specs=[
                    pl.BlockSpec((1, C_out, tile_n), lambda b, j: (b, 0, j)),
                    pl.BlockSpec((1, C_out, tile_n), lambda b, j: (b, 0, j)),
                ],
            ),
            compiler_params=pltpu.CompilerParams(
                dimension_semantics=("parallel", "parallel"),
                vmem_limit_bytes=vmem_limit),
            cost_estimate=cost,
        )(x3, w_cat, b_cat)

    return o1.reshape(B, C_out, H, W), o2.reshape(B, C_out, H, W)


def enet_base_forward(params, x):
    """EnetBase.forward: body -> layer4 feats -> (decoder1(x), decoder2(x))."""
    # self.body = IntermediateLayerGetter(backbone, {'layer4': '0'}); the backbone
    # is an externally injected nn.Module (e.g. a ResNet) whose internals are not
    # defined by this class.  Stand-in: one deterministic 3x3 stride-2 conv
    # producing layer4-like features.  For a real backbone prefer NHWC convs
    # (XLA TPU's native conv layout) and transpose once into the decoder's
    # (B, C, H*W) spatial-in-lanes layout.
    # TODO(synk): the real injected backbone is not reproducible from this module alone.
    feats = lax.conv_general_dilated(
        x, params["backbone_w"], window_strides=(2, 2), padding="SAME",
        dimension_numbers=("NCHW", "OIHW", "NCHW"))
    return enet_decoders(feats, params["w_cat"], params["b_cat"])


if __name__ == "__main__":
    # Small shapes consistent with the module:
    B, IN_CH, H, W = 2, 4, 16, 16          # input image (NCHW)
    LAYER_CH = 32                           # layer_channels[-1]
    NOISE_CH = 8                            # noise_channels

    key = jax.random.PRNGKey(0)
    k_bb, k_w1, k_b1, k_w2, k_b2, k_x = jax.random.split(key, 6)

    backbone_w = 0.1 * jax.random.normal(k_bb, (LAYER_CH, IN_CH, 3, 3), jnp.float32)
    w1 = 0.1 * jax.random.normal(k_w1, (NOISE_CH, LAYER_CH, 1, 1), jnp.float32)
    b1 = 0.1 * jax.random.normal(k_b1, (NOISE_CH,), jnp.float32)
    w2 = 0.1 * jax.random.normal(k_w2, (NOISE_CH, LAYER_CH, 1, 1), jnp.float32)
    b2 = 0.1 * jax.random.normal(k_b2, (NOISE_CH,), jnp.float32)

    # One-time parameter preprocessing (hoisted out of the jitted forward).
    w_cat, b_cat = fuse_decoder_params(w1, b1, w2, b2)
    params = {"backbone_w": backbone_w, "w_cat": w_cat, "b_cat": b_cat}

    x = jax.random.normal(k_x, (B, IN_CH, H, W), jnp.float32)

    out1, out2 = jax.jit(enet_base_forward)(params, x)
    jax.block_until_ready((out1, out2))

    # --- reference check (f32, small-spatial single-step path) ---
    feats = lax.conv_general_dilated(
        x, backbone_w, window_strides=(2, 2), padding="SAME",
        dimension_numbers=("NCHW", "OIHW", "NCHW"))
    ref1 = jnp.einsum("bchw,oc->bohw", feats, w1.reshape(NOISE_CH, LAYER_CH)) \
        + b1[None, :, None, None]
    ref2 = jnp.einsum("bchw,oc->bohw", feats, w2.reshape(NOISE_CH, LAYER_CH)) \
        + b2[None, :, None, None]
    assert out1.shape == (B, NOISE_CH, H // 2, W // 2)
    assert out2.shape == (B, NOISE_CH, H // 2, W // 2)
    assert jnp.allclose(out1, ref1, atol=2e-5), "decoder1 mismatch (small path)"
    assert jnp.allclose(out2, ref2, atol=2e-5), "decoder2 mismatch (small path)"

    # --- tiled path check (B=1 -> spatial axis split into >=2 parallel tiles) ---
    feats_big = jax.random.normal(jax.random.PRNGKey(1), (1, LAYER_CH, 32, 32),
                                  jnp.float32)
    t1, t2 = jax.jit(lambda f: enet_decoders(f, w_cat, b_cat))(feats_big)
    jax.block_until_ready((t1, t2))
    r1 = jnp.einsum("bchw,oc->bohw", feats_big, w1.reshape(NOISE_CH, LAYER_CH)) \
        + b1[None, :, None, None]
    r2 = jnp.einsum("bchw,oc->bohw", feats_big, w2.reshape(NOISE_CH, LAYER_CH)) \
        + b2[None, :, None, None]
    assert jnp.allclose(t1, r1, atol=2e-5), "decoder1 mismatch (tiled path)"
    assert jnp.allclose(t2, r2, atol=2e-5), "decoder2 mismatch (tiled path)"

    # --- bf16 streaming path (halves HBM traffic; f32 MXU accumulation) ---
    w_cat_bf, b_cat_bf = fuse_decoder_params(w1, b1, w2, b2,
                                             compute_dtype=jnp.bfloat16)
    q1, q2 = jax.jit(lambda f: enet_decoders(f, w_cat_bf, b_cat_bf,
                                             out_dtype=jnp.float32))(
        feats_big.astype(jnp.bfloat16))
    jax.block_until_ready((q1, q2))
    assert jnp.allclose(q1, r1, atol=5e-2), "decoder1 mismatch (bf16 path)"
    assert jnp.allclose(q2, r2, atol=5e-2), "decoder2 mismatch (bf16 path)"

    print("KERNEL_OK")
</pallas_src>

<mosaic_0001>
module attributes {stable_mosaic.version = 11 : i64} {
  func.func @_decoder_small_kernel(%arg0: i32, %arg1: memref<2x32x64xf32, #tpu.memory_space<vmem>>, %arg2: memref<16x32xf32, #tpu.memory_space<vmem>>, %arg3: memref<16x1xf32, #tpu.memory_space<vmem>>, %arg4: memref<2x8x64xf32, #tpu.memory_space<vmem>>, %arg5: memref<2x8x64xf32, #tpu.memory_space<vmem>>) attributes {dimension_semantics = [#tpu.dimension_semantics<arbitrary>], iteration_bounds = array<i64: 1>, scalar_prefetch = 0 : i64, scratch_operands = 0 : i64, tpu.core_type = #tpu.core_type<tc>, window_params = [{pipeline_mode = #tpu.pipeline_mode<synchronous>, transform_indices = @transform_0, window_bounds = array<i64: 2, 32, 64>}, {pipeline_mode = #tpu.pipeline_mode<synchronous>, transform_indices = @transform_1, window_bounds = array<i64: 16, 32>}, {pipeline_mode = #tpu.pipeline_mode<synchronous>, transform_indices = @transform_2, window_bounds = array<i64: 16, 1>}, {pipeline_mode = #tpu.pipeline_mode<synchronous>, transform_indices = @transform_3, window_bounds = array<i64: 2, 8, 64>}, {pipeline_mode = #tpu.pipeline_mode<synchronous>, transform_indices = @transform_4, window_bounds = array<i64: 2, 8, 64>}]} {
    %c0 = arith.constant 0 : index
    %c0_0 = arith.constant 0 : index
    %0 = vector.load %arg2[%c0, %c0_0] : memref<16x32xf32, #tpu.memory_space<vmem>>, vector<16x32xf32>
    %c0_1 = arith.constant 0 : index
    %c0_2 = arith.constant 0 : index
    %1 = vector.load %arg3[%c0_1, %c0_2] : memref<16x1xf32, #tpu.memory_space<vmem>>, vector<16x1xf32>
    %c0_3 = arith.constant 0 : index
    %c0_4 = arith.constant 0 : index
    %c0_5 = arith.constant 0 : index
    %2 = vector.load %arg1[%c0_3, %c0_4, %c0_5] : memref<2x32x64xf32, #tpu.memory_space<vmem>>, vector<1x32x64xf32>
    %3 = vector.shape_cast %2 : vector<1x32x64xf32> to vector<32x64xf32>
    %cst = arith.constant dense<0.000000e+00> : vector<16x64xf32>
    %4 = tpu.matmul %0, %3, %cst {dimension_numbers = #tpu.dot_dimension_numbers<[1], [0], [0], [1], [0, 0, 1, 1], [], []>} : vector<16x32xf32>, vector<32x64xf32>, vector<16x64xf32> -> vector<16x64xf32>
    %5 = vector.broadcast %1 : vector<16x1xf32> to vector<16x64xf32>
    %6 = arith.addf %4, %5 : vector<16x64xf32>
    %7 = vector.extract_strided_slice %6 {offsets = [0, 0], sizes = [8, 64], strides = [1, 1]} : vector<16x64xf32> to vector<8x64xf32>
    %c0_6 = arith.constant 0 : index
    %c0_7 = arith.constant 0 : index
    %c0_8 = arith.constant 0 : index
    %8 = vector.load %arg4[%c0_6, %c0_7, %c0_8] : memref<2x8x64xf32, #tpu.memory_space<vmem>>, vector<1x8x64xf32>
    %9 = vector.shape_cast %8 : vector<1x8x64xf32> to vector<8x64xf32>
    %10 = vector.shape_cast %7 : vector<8x64xf32> to vector<1x8x64xf32>
    tpu.vector_store %arg4[%c0_6, %c0_7, %c0_8], %10 {strides = array<i32>} : memref<2x8x64xf32, #tpu.memory_space<vmem>>, vector<1x8x64xf32>,
    %11 = vector.extract_strided_slice %6 {offsets = [8, 0], sizes = [8, 64], strides = [1, 1]} : vector<16x64xf32> to vector<8x64xf32>
    %c0_9 = arith.constant 0 : index
    %c0_10 = arith.constant 0 : index
    %c0_11 = arith.constant 0 : index
    %12 = vector.load %arg5[%c0_9, %c0_10, %c0_11] : memref<2x8x64xf32, #tpu.memory_space<vmem>>, vector<1x8x64xf32>
    %13 = vector.shape_cast %12 : vector<1x8x64xf32> to vector<8x64xf32>
    %14 = vector.shape_cast %11 : vector<8x64xf32> to vector<1x8x64xf32>
    tpu.vector_store %arg5[%c0_9, %c0_10, %c0_11], %14 {strides = array<i32>} : memref<2x8x64xf32, #tpu.memory_space<vmem>>, vector<1x8x64xf32>,
    %c1 = arith.constant 1 : index
    %c0_12 = arith.constant 0 : index
    %c0_13 = arith.constant 0 : index
    %15 = vector.load %arg1[%c1, %c0_12, %c0_13] : memref<2x32x64xf32, #tpu.memory_space<vmem>>, vector<1x32x64xf32>
    %16 = vector.shape_cast %15 : vector<1x32x64xf32> to vector<32x64xf32>
    %cst_14 = arith.constant dense<0.000000e+00> : vector<16x64xf32>
    %17 = tpu.matmul %0, %16, %cst_14 {dimension_numbers = #tpu.dot_dimension_numbers<[1], [0], [0], [1], [0, 0, 1, 1], [], []>} : vector<16x32xf32>, vector<32x64xf32>, vector<16x64xf32> -> vector<16x64xf32>
    %18 = vector.broadcast %1 : vector<16x1xf32> to vector<16x64xf32>
    %19 = arith.addf %17, %18 : vector<16x64xf32>
    %20 = vector.extract_strided_slice %19 {offsets = [0, 0], sizes = [8, 64], strides = [1, 1]} : vector<16x64xf32> to vector<8x64xf32>
    %c1_15 = arith.constant 1 : index
    %c0_16 = arith.constant 0 : index
    %c0_17 = arith.constant 0 : index
    %21 = vector.load %arg4[%c1_15, %c0_16, %c0_17] : memref<2x8x64xf32, #tpu.memory_space<vmem>>, vector<1x8x64xf32>
    %22 = vector.shape_cast %21 : vector<1x8x64xf32> to vector<8x64xf32>
    %23 = vector.shape_cast %20 : vector<8x64xf32> to vector<1x8x64xf32>
    tpu.vector_store %arg4[%c1_15, %c0_16, %c0_17], %23 {strides = array<i32>} : memref<2x8x64xf32, #tpu.memory_space<vmem>>, vector<1x8x64xf32>,
    %24 = vector.extract_strided_slice %19 {offsets = [8, 0], sizes = [8, 64], strides = [1, 1]} : vector<16x64xf32> to vector<8x64xf32>
    %c1_18 = arith.constant 1 : index
    %c0_19 = arith.constant 0 : index
    %c0_20 = arith.constant 0 : index
    %25 = vector.load %arg5[%c1_18, %c0_19, %c0_20] : memref<2x8x64xf32, #tpu.memory_space<vmem>>, vector<1x8x64xf32>
    %26 = vector.shape_cast %25 : vector<1x8x64xf32> to vector<8x64xf32>
    %27 = vector.shape_cast %24 : vector<8x64xf32> to vector<1x8x64xf32>
    tpu.vector_store %arg5[%c1_18, %c0_19, %c0_20], %27 {strides = array<i32>} : memref<2x8x64xf32, #tpu.memory_space<vmem>>, vector<1x8x64xf32>,
    return
  }
  func.func @transform_0(%arg0: i32) -> (i32, i32, i32) {
    %c0_i32 = arith.constant 0 : i32
    %c0_i32_0 = arith.constant 0 : i32
    %c0_i32_1 = arith.constant 0 : i32
    %c0_i32_2 = arith.constant 0 : i32
    return %c0_i32, %c0_i32_0, %c0_i32_1 : i32, i32, i32
  }
  func.func @transform_1(%arg0: i32) -> (i32, i32) {
    %c0_i32 = arith.constant 0 : i32
    %c0_i32_0 = arith.constant 0 : i32
    %c0_i32_1 = arith.constant 0 : i32
    return %c0_i32, %c0_i32_0 : i32, i32
  }
  func.func @transform_2(%arg0: i32) -> (i32, i32) {
    %c0_i32 = arith.constant 0 : i32
    %c0_i32_0 = arith.constant 0 : i32
    %c0_i32_1 = arith.constant 0 : i32
    return %c0_i32, %c0_i32_0 : i32, i32
  }
  func.func @transform_3(%arg0: i32) -> (i32, i32, i32) {
    %c0_i32 = arith.constant 0 : i32
    %c0_i32_0 = arith.constant 0 : i32
    %c0_i32_1 = arith.constant 0 : i32
    %c0_i32_2 = arith.constant 0 : i32
    return %c0_i32, %c0_i32_0, %c0_i32_1 : i32, i32, i32
  }
  func.func @transform_4(%arg0: i32) -> (i32, i32, i32) {
    %c0_i32 = arith.constant 0 : i32
    %c0_i32_0 = arith.constant 0 : i32
    %c0_i32_1 = arith.constant 0 : i32
    %c0_i32_2 = arith.constant 0 : i32
    return %c0_i32, %c0_i32_0, %c0_i32_1 : i32, i32, i32
  }
}

</mosaic_0001>

<llo_original>
// kernel: enet_base_forward.1
$region0: #{enet_base_forward.1}
  #allocation0 [shape = 'u32[]', space=smem, size = 0x4, offset = 0x4, fixed_abs, tag = 'smem constant byte address 0x4 - core index']
  #allocation1 [shape = 'u32[144,128]{1,0:T(1,128)}', space=vmem, size = 0x12000, scoped, tag = 'internal scratch']
  %s0 = inlined_call_operand.vmem [shape: f32[2,32,64], index: 0, kind: input, shape index: {}]
  %s1 = inlined_call_operand.vmem [shape: f32[16,32], index: 1, kind: input, shape index: {}]
  %s2 = inlined_call_operand.vmem [shape: f32[16,1], index: 2, kind: input, shape index: {}]
  %s3 = inlined_call_operand.vmem [shape: f32[2,8,64], index: 3, kind: output, shape index: {0}]
  %s4 = inlined_call_operand.vmem [shape: f32[2,8,64], index: 4, kind: output, shape index: {1}]
  %5 = xla_tuple %s3, %s4
  %s6 = sld [smem:[#allocation0]]
  $region30: #{enet_base_forward.1} parent=0
    _
  %s8 = ssub.s32 1, %s6
  %s9 = scalar_select 0, %s8, %s6
  // Predicated region
  $region2: #{enet_base_forward.1} parent=0 // pred_check
    _
  $region3: #{enet_base_forward.1} parent=0 // pred_check_branch
    %11 = sbr.rel (0) target = $region5
  $region4: #{enet_base_forward.1} parent=0 // pred_region
    _
  $region5: #{enet_base_forward.1} parent=0 // pred_fallthru
    _
  // Predicated region
  $region6: #{enet_base_forward.1} parent=0 // pred_check
    _
  $region7: #{enet_base_forward.1} parent=0 // pred_check_branch
    %13 = sbr.rel (0) target = $region9
  $region8: #{enet_base_forward.1} parent=0 // pred_region
    _
  $region9: #{enet_base_forward.1} parent=0 // pred_fallthru
    _
  // Predicated region
  $region10: #{enet_base_forward.1} parent=0 // pred_check
    _
  $region11: #{enet_base_forward.1} parent=0 // pred_check_branch
    %15 = sbr.rel (0) target = $region13
  $region12: #{enet_base_forward.1} parent=0 // pred_region
    _
  $region13: #{enet_base_forward.1} parent=0 // pred_fallthru
    _
  %v16 = vld [vmem:[%s1] sm:$0xff]
  %v17 = vld [vmem:[%s1 + $0x8] sm:$0xff]
  %v18 = vld [vmem:[%s2] sm:$0xff]
  %v19 = vld [vmem:[%s2 + $0x8] sm:$0xff]
  %v20 = vld [vmem:[%s0] sm:$0xff]
  %v21 = vld [vmem:[%s0 + $0x8] sm:$0xff]
  %v22 = vld [vmem:[%s0 + $0x10] sm:$0xff]
  %v23 = vld [vmem:[%s0 + $0x18] sm:$0xff]
  %25 = vset.pattern.permute.xlu0 0
  %26 = vperm.xlu0 %25, %v18
  %v27 = vpop.permute.xlu0 %26
  %30 = vset.pattern.permute.xlu0 0
  %31 = vperm.xlu0 %30, %v19
  %v32 = vpop.permute.xlu0 %31
  %vm34 = vcmask 261120
  %v36 = vsel %vm34, %v16, 0
  %v39 = vsel %vm34, %v17, 0
  %41 = vmatprep.subr.mxu0 0.0
  %42 = vmatpush1.msra.mxu0 %v20
  %43 = vmatprep.subr.mxu0 0.0
  %44 = vmatpush1.msra.mxu0 %v21
  %45 = vmatprep.subr.mxu0 0.0
  %46 = vmatpush1.msra.mxu0 %v22
  %47 = vmatprep.subr.mxu0 0.0
  %48 = vmatpush1.msra.mxu0 %v23
  %49 = vmatprep.subr.mxu0 0.0
  %50 = vmatpush1.msra.mxu0 0.0
  %51 = vmatprep.subr.mxu0 0.0
  %52 = vmatpush1.msra.mxu0 0.0
  %53 = vmatprep.subr.mxu0 0.0
  %54 = vmatpush1.msra.mxu0 0.0
  %55 = vmatprep.subr.mxu0 0.0
  %56 = vmatpush1.msra.mxu0 0.0
  %57 = vmatprep.subr.mxu0 0.0
  %58 = vmatpush1.msra.mxu0 0.0
  %59 = vmatprep.subr.mxu0 0.0
  %60 = vmatpush1.msra.mxu0 0.0
  %61 = vmatprep.subr.mxu0 0.0
  %62 = vmatpush1.msra.mxu0 0.0
  %63 = vmatprep.subr.mxu0 0.0
  %64 = vmatpush1.msra.mxu0 0.0
  %65 = vmatprep.subr.mxu0 0.0
  %66 = vmatpush1.msra.mxu0 0.0
  %67 = vmatprep.subr.mxu0 0.0
  %68 = vmatpush1.msra.mxu0 0.0
  %69 = vmatprep.subr.mxu0 0.0
  %70 = vmatpush1.msra.mxu0 0.0
  %71 = vmatprep.subr.mxu0 0.0
  %72 = vmatpush1.msra.mxu0 0.0
  %73 = vmatprep.subr.mxu0 0.0
  %74 = vmatpush1.msra.mxu0 0.0
  %75 = vmatprep.subr.mxu0 0.0
  %76 = vmatpush1.msra.mxu0 0.0
  %77 = vmatprep.subr.mxu0 0.0
  %78 = vmatpush1.msra.mxu0 0.0
  %79 = vmatprep.subr.mxu0 0.0
  %80 = vmatpush1.msra.mxu0 0.0
  %81 = vmatprep.subr.mxu0 0.0
  %82 = vmatpush1.msra.mxu0 0.0
  %83 = vmatprep.subr.mxu0 0.0
  %84 = vmatpush1.msra.mxu0 0.0
  %85 = vmatprep.subr.mxu0 0.0
  %86 = vmatpush1.msra.mxu0 0.0
  %87 = vmatprep.subr.mxu0 0.0
  %88 = vmatpush1.msra.mxu0 0.0
  %89 = vmatprep.subr.mxu0 0.0
  %90 = vmatpush1.msra.mxu0 0.0
  %91 = vmatprep.subr.mxu0 0.0
  %92 = vmatpush1.msra.mxu0 0.0
  %93 = vmatprep.subr.mxu0 0.0
  %94 = vmatpush1.msra.mxu0 0.0
  %95 = vmatprep.subr.mxu0 0.0
  %96 = vmatpush1.msra.mxu0 0.0
  %97 = vmatprep.subr.mxu0 0.0
  %98 = vmatpush1.msra.mxu0 0.0
  %99 = vmatprep.subr.mxu0 0.0
  %100 = vmatpush1.msra.mxu0 0.0
  %101 = vmatprep.subr.mxu0 0.0
  %102 = vmatpush1.msra.mxu0 0.0
  %103 = vmatprep.subr.mxu0 0.0
  %104 = vmatpush1.msra.mxu0 0.0
  %105 = vmatprep.mubr.f32.mxu0 0.0
  %106 = vmatmul.mubr.f32.gmra.mrb[0].mxu0 %v36
  %v107 = vpop.f32.mrb[0].mxu0
  %v108 = vadd.f32 %v27, %v107
  %v109 = vpop.f32.mrb[0].mxu0
  %110 = vmatprep.mubr.f32.mxu0 0.0
  %111 = vmatmul.mubr.f32.gmra.mrb[0].mxu0 %v39
  %v112 = vpop.f32.mrb[0].mxu0
  %v113 = vadd.f32 %v32, %v112
  %v114 = vpop.f32.mrb[0].mxu0
  %115 = vdwg.mxu0
  %vm116 = vcmask 523264
  %117 = vst.msk [vmem:[%s3] sm:$0xff] %vm116, %v108
  %118 = vst.msk [vmem:[%s4] sm:$0xff] %vm116, %v113
  %s119 = scalar_lea.vmem %s0, 32
  %v120 = vld [vmem:[%s119] sm:$0xff]
  %v121 = vld [vmem:[%s119 + $0x8] sm:$0xff]
  %v122 = vld [vmem:[%s119 + $0x10] sm:$0xff]
  %v123 = vld [vmem:[%s119 + $0x18] sm:$0xff]
  %124 = vmatprep.subr.mxu0 0.0
  %125 = vmatpush1.msra.mxu0 %v120
  %126 = vmatprep.subr.mxu0 0.0
  %127 = vmatpush1.msra.mxu0 %v121
  %128 = vmatprep.subr.mxu0 0.0
  %129 = vmatpush1.msra.mxu0 %v122
  %130 = vmatprep.subr.mxu0 0.0
  %131 = vmatpush1.msra.mxu0 %v123
  %132 = vmatprep.subr.mxu0 0.0
  %133 = vmatpush1.msra.mxu0 0.0
  %134 = vmatprep.subr.mxu0 0.0
  %135 = vmatpush1.msra.mxu0 0.0
  %136 = vmatprep.subr.mxu0 0.0
  %137 = vmatpush1.msra.mxu0 0.0
  %138 = vmatprep.subr.mxu0 0.0
  %139 = vmatpush1.msra.mxu0 0.0
  %140 = vmatprep.subr.mxu0 0.0
  %141 = vmatpush1.msra.mxu0 0.0
  %142 = vmatprep.subr.mxu0 0.0
  %143 = vmatpush1.msra.mxu0 0.0
  %144 = vmatprep.subr.mxu0 0.0
  %145 = vmatpush1.msra.mxu0 0.0
  %146 = vmatprep.subr.mxu0 0.0
  %147 = vmatpush1.msra.mxu0 0.0
  %148 = vmatprep.subr.mxu0 0.0
  %149 = vmatpush1.msra.mxu0 0.0
  %150 = vmatprep.subr.mxu0 0.0
  %151 = vmatpush1.msra.mxu0 0.0
  %152 = vmatprep.subr.mxu0 0.0
  %153 = vmatpush1.msra.mxu0 0.0
  %154 = vmatprep.subr.mxu0 0.0
  %155 = vmatpush1.msra.mxu0 0.0
  %156 = vmatprep.subr.mxu0 0.0
  %157 = vmatpush1.msra.mxu0 0.0
  %158 = vmatprep.subr.mxu0 0.0
  %159 = vmatpush1.msra.mxu0 0.0
  %160 = vmatprep.subr.mxu0 0.0
  %161 = vmatpush1.msra.mxu0 0.0
  %162 = vmatprep.subr.mxu0 0.0
  %163 = vmatpush1.msra.mxu0 0.0
  %164 = vmatprep.subr.mxu0 0.0
  %165 = vmatpush1.msra.mxu0 0.0
  %166 = vmatprep.subr.mxu0 0.0
  %167 = vmatpush1.msra.mxu0 0.0
  %168 = vmatprep.subr.mxu0 0.0
  %169 = vmatpush1.msra.mxu0 0.0
  %170 = vmatprep.subr.mxu0 0.0
  %171 = vmatpush1.msra.mxu0 0.0
  %172 = vmatprep.subr.mxu0 0.0
  %173 = vmatpush1.msra.mxu0 0.0
  %174 = vmatprep.subr.mxu0 0.0
  %175 = vmatpush1.msra.mxu0 0.0
  %176 = vmatprep.subr.mxu0 0.0
  %177 = vmatpush1.msra.mxu0 0.0
  %178 = vmatprep.subr.mxu0 0.0
  %179 = vmatpush1.msra.mxu0 0.0
  %180 = vmatprep.subr.mxu0 0.0
  %181 = vmatpush1.msra.mxu0 0.0
  %182 = vmatprep.subr.mxu0 0.0
  %183 = vmatpush1.msra.mxu0 0.0
  %184 = vmatprep.subr.mxu0 0.0
  %185 = vmatpush1.msra.mxu0 0.0
  %186 = vmatprep.subr.mxu0 0.0
  %187 = vmatpush1.msra.mxu0 0.0
  %188 = vmatprep.mubr.f32.mxu0 0.0
  %189 = vmatmul.mubr.f32.gmra.mrb[0].mxu0 %v36
  %v190 = vpop.f32.mrb[0].mxu0
  %v191 = vadd.f32 %v27, %v190
  %v192 = vpop.f32.mrb[0].mxu0
  %193 = vmatprep.mubr.f32.mxu0 0.0
  %194 = vmatmul.mubr.f32.gmra.mrb[0].mxu0 %v39
  %v195 = vpop.f32.mrb[0].mxu0
  %v196 = vadd.f32 %v32, %v195
  %v197 = vpop.f32.mrb[0].mxu0
  %198 = vdwg.mxu0
  %s199 = scalar_lea.vmem %s3, 8
  %200 = vst.msk [vmem:[%s199] sm:$0xff] %vm116, %v191
  %s201 = scalar_lea.vmem %s4, 8
  %202 = vst.msk [vmem:[%s201] sm:$0xff] %vm116, %v196
  // Predicated region
  $region14: #{enet_base_forward.1} parent=0 // pred_check
    _
  $region15: #{enet_base_forward.1} parent=0 // pred_check_branch
    %204 = sbr.rel (0) target = $region17
  $region16: #{enet_base_forward.1} parent=0 // pred_region
    _
  $region17: #{enet_base_forward.1} parent=0 // pred_fallthru
    _
  // Predicated region
  $region18: #{enet_base_forward.1} parent=0 // pred_check
    _
  $region19: #{enet_base_forward.1} parent=0 // pred_check_branch
    %206 = sbr.rel (0) target = $region21
  $region20: #{enet_base_forward.1} parent=0 // pred_region
    _
  $region21: #{enet_base_forward.1} parent=0 // pred_fallthru
    _
  // Predicated region
  $region22: #{enet_base_forward.1} parent=0 // pred_check
    _
  $region23: #{enet_base_forward.1} parent=0 // pred_check_branch
    %208 = sbr.rel (0) target = $region25
  $region24: #{enet_base_forward.1} parent=0 // pred_region
    _
  $region25: #{enet_base_forward.1} parent=0 // pred_fallthru
    _
  // Predicated region
  $region26: #{enet_base_forward.1} parent=0 // pred_check
    _
  $region27: #{enet_base_forward.1} parent=0 // pred_check_branch
    %210 = sbr.rel (0) target = $region29
  $region28: #{enet_base_forward.1} parent=0 // pred_region
    _
  $region29: #{enet_base_forward.1} parent=0 // pred_fallthru
    _

</llo_original>
